<compile_context>
chip_gen: v6e
topology: v6e:2x2x1
jax: 0.10.0
libtpu: 0.0.40
codegen_flags: <defaults>
</compile_context>

<pallas_src>
import functools

import numpy as np
import jax
import jax.numpy as jnp
from jax import lax
from jax.experimental import pallas as pl
from jax.experimental.pallas import tpu as pltpu


def fused_conv_bn_relu_kernel(x_ref, wb_ref, proj_ref, gamma_ref, beta_ref, out_ref,
                              *, KH, eps):
    """Fused conv (KH banded matmuls) + BatchNorm(batch stats) + ReLU.

    x_ref:     (KH, N*H, Wp*Cin)   row-shifted, lane-dense input rows
    wb_ref:    (KH, Wp*Cin, W*Cout) banded weights
    proj_ref:  (W*Cout, W*Cout)     channel-averaging projector (includes 1/count)
    gamma_ref: (1, W*Cout)          per-channel affine, tiled over w
    beta_ref:  (1, W*Cout)
    out_ref:   (N*H, W*Cout)        lane-dense output slab (last dim = 128)
    """
    NH = out_ref.shape[0]
    WC = out_ref.shape[1]

    # ---- Convolution: KH MXU matmuls, f32 accumulation, stays on-chip --------
    acc = jnp.zeros((NH, WC), jnp.float32)
    for kh in range(KH):  # static unroll (KH = 3)
        acc = acc + jnp.dot(x_ref[kh], wb_ref[kh],
                            preferred_element_type=jnp.float32)

    # ---- BatchNorm batch statistics (lane-dense, two-pass variance) ----------
    col_sum = jnp.sum(acc, axis=0, keepdims=True)                      # (1, WC)
    mean = jnp.dot(col_sum, proj_ref[...],
                   preferred_element_type=jnp.float32)                 # per-channel mean, broadcast over lanes
    centered = acc - mean
    col_sq = jnp.sum(centered * centered, axis=0, keepdims=True)
    var = jnp.dot(col_sq, proj_ref[...],
                  preferred_element_type=jnp.float32)                  # per-channel biased variance

    # ---- Normalize + affine + ReLU, lane-dense unmasked store ----------------
    scale = gamma_ref[...] * lax.rsqrt(var + eps)
    out_ref[...] = jnp.maximum(centered * scale + beta_ref[...], 0.0)


def conv_bn_relu(x_nchw, weight_oihw, bias, gamma, beta, *, eps=1e-5, padding=1,
                 compute_dtype=jnp.float32):
    """Forward pass of ConvBNReLU2D(norm='BN', act='ReLU') in NCHW, via one Pallas call.

    `bias` is accepted (module has bias=True) but NOT fed to the kernel: with
    training-mode BatchNorm the bias is exactly cancelled by mean subtraction.
    Set compute_dtype=jnp.bfloat16 to feed bf16 MXU operands (v5e); f32 accumulation.
    """
    del bias  # mathematically cancelled by the BN mean subtraction
    N, Cin, H, W = x_nchw.shape
    Cout, Cin_w, KH, KW = weight_oihw.shape
    assert Cin_w == Cin
    Hp, Wp = H + 2 * padding, W + 2 * padding
    NH, WC, RC = N * H, W * Cout, Wp * Cin
    count = N * H * W

    # ---- XLA-side layout plumbing (all tiny, done once) ----------------------
    x = jnp.transpose(x_nchw, (0, 2, 3, 1)).astype(jnp.float32)          # NHWC
    xp = jnp.pad(x, ((0, 0), (padding, padding), (padding, padding), (0, 0)))
    xrows = xp.reshape(N, Hp, RC)                                        # lane-dense rows
    # KH row-shifted views: x_stack[kh, n*H+h, :] = padded row (h+kh) of image n.
    x_stack = jnp.stack(
        [xrows[:, kh:kh + H, :].reshape(NH, RC) for kh in range(KH)], axis=0
    ).astype(compute_dtype)

    # Banded weights: bands[kh, (w+kw)*Cin + ci, w*Cout + co] = weight[co, ci, kh, kw]
    w_hwio = jnp.transpose(weight_oihw, (2, 3, 1, 0)).astype(jnp.float32)  # (KH,KW,Cin,Cout)
    rw = np.arange(Wp)
    wc = np.arange(W)
    kw_idx = rw[:, None] - wc[None, :]                                     # (Wp, W)
    valid = ((kw_idx >= 0) & (kw_idx < KW)).astype(np.float32)
    kw_clamped = np.clip(kw_idx, 0, KW - 1)
    bands = w_hwio[:, kw_clamped, :, :]                                    # (KH, Wp, W, Cin, Cout)
    bands = bands * valid[None, :, :, None, None]
    bands = jnp.transpose(bands, (0, 1, 3, 2, 4)).reshape(KH, RC, WC)
    bands = bands.astype(compute_dtype)

    # Channel-averaging projector (1/count folded in): (1,WC) row-sums @ proj
    # -> per-channel mean already broadcast to every lane of that channel.
    lanes = np.arange(WC)
    proj = jnp.asarray((lanes[:, None] % Cout) == (lanes[None, :] % Cout),
                       dtype=jnp.float32) / float(count)

    gamma_l = jnp.tile(gamma.astype(jnp.float32), W).reshape(1, WC)
    beta_l = jnp.tile(beta.astype(jnp.float32), W).reshape(1, WC)

    itemsize = jnp.dtype(compute_dtype).itemsize
    cost = pl.CostEstimate(
        flops=int(2 * count * KH * KW * Cin * Cout + 2 * 2 * WC * WC),
        transcendentals=int(WC),
        bytes_accessed=int(x_stack.size * itemsize + bands.size * itemsize
                           + proj.size * 4 + 2 * WC * 4 + NH * WC * 4),
    )

    kern = functools.partial(fused_conv_bn_relu_kernel, KH=KH, eps=eps)
    out = pl.pallas_call(
        kern,
        out_shape=jax.ShapeDtypeStruct((NH, WC), jnp.float32),
        grid=(1,),  # whole batch per step; chunk N here (with partial-sum outputs) when scaling up
        in_specs=[
            pl.BlockSpec((KH, NH, RC), lambda i: (0, 0, 0)),
            pl.BlockSpec((KH, RC, WC), lambda i: (0, 0, 0)),
            pl.BlockSpec((WC, WC), lambda i: (0, 0)),
            pl.BlockSpec((1, WC), lambda i: (0, 0)),
            pl.BlockSpec((1, WC), lambda i: (0, 0)),
        ],
        out_specs=pl.BlockSpec((NH, WC), lambda i: (0, 0)),
        compiler_params=pltpu.CompilerParams(
            dimension_semantics=("arbitrary",)),
        cost_estimate=cost,
    )(x_stack, bands, proj, gamma_l, beta_l)

    # (N*H, W*Cout) -> (N, H, W, Cout) -> NCHW
    return jnp.transpose(out.reshape(N, H, W, Cout), (0, 3, 1, 2))


if __name__ == "__main__":
    key = jax.random.PRNGKey(0)
    N, Cin, H, W = 2, 4, 16, 16
    Cout, K = 8, 3
    k1, k2, k3 = jax.random.split(key, 3)

    # Deterministic parameter init (torch Conv2d-style kaiming-uniform bounds).
    fan_in = Cin * K * K
    bound = 1.0 / (fan_in ** 0.5)
    weight = jax.random.uniform(k1, (Cout, Cin, K, K), jnp.float32, -bound, bound)
    bias = jax.random.uniform(k2, (Cout,), jnp.float32, -bound, bound)
    gamma = jnp.ones((Cout,), jnp.float32)    # BatchNorm2d default affine init
    beta = jnp.zeros((Cout,), jnp.float32)
    x = jax.random.normal(k3, (N, Cin, H, W), jnp.float32)

    fwd = jax.jit(conv_bn_relu)
    y = jax.block_until_ready(fwd(x, weight, bias, gamma, beta))

    # Pure-JAX reference matching the PyTorch module forward
    # (conv+bias -> BN with batch stats, biased variance -> ReLU).
    x_nhwc = jnp.transpose(x, (0, 2, 3, 1))
    w_hwio = jnp.transpose(weight, (2, 3, 1, 0))
    conv_ref = lax.conv_general_dilated(
        x_nhwc, w_hwio, window_strides=(1, 1), padding=[(1, 1), (1, 1)],
        dimension_numbers=("NHWC", "HWIO", "NHWC")) + bias
    m = jnp.mean(conv_ref, axis=(0, 1, 2))
    v = jnp.mean((conv_ref - m) ** 2, axis=(0, 1, 2))
    ref = jnp.maximum(gamma * (conv_ref - m) / jnp.sqrt(v + 1e-5) + beta, 0.0)
    ref = jnp.transpose(ref, (0, 3, 1, 2))

    assert y.shape == (N, Cout, H, W)
    err = float(jnp.max(jnp.abs(y - ref)))
    assert jnp.allclose(y, ref, atol=1e-3, rtol=1e-3), f"mismatch vs reference (max abs err {err})"
    print("KERNEL_OK")
</pallas_src>

<mosaic_0001>
module attributes {stable_mosaic.version = 11 : i64} {
  func.func @fused_conv_bn_relu_kernel(%arg0: i32, %arg1: memref<3x32x72xf32, #tpu.memory_space<vmem>>, %arg2: memref<3x72x128xf32, #tpu.memory_space<vmem>>, %arg3: memref<128x128xf32, #tpu.memory_space<vmem>>, %arg4: memref<1x128xf32, #tpu.memory_space<vmem>>, %arg5: memref<1x128xf32, #tpu.memory_space<vmem>>, %arg6: memref<32x128xf32, #tpu.memory_space<vmem>>) attributes {dimension_semantics = [#tpu.dimension_semantics<arbitrary>], iteration_bounds = array<i64: 1>, scalar_prefetch = 0 : i64, scratch_operands = 0 : i64, tpu.core_type = #tpu.core_type<tc>, window_params = [{pipeline_mode = #tpu.pipeline_mode<synchronous>, transform_indices = @transform_0, window_bounds = array<i64: 3, 32, 72>}, {pipeline_mode = #tpu.pipeline_mode<synchronous>, transform_indices = @transform_1, window_bounds = array<i64: 3, 72, 128>}, {pipeline_mode = #tpu.pipeline_mode<synchronous>, transform_indices = @transform_2, window_bounds = array<i64: 128, 128>}, {pipeline_mode = #tpu.pipeline_mode<synchronous>, transform_indices = @transform_3, window_bounds = array<i64: 1, 128>}, {pipeline_mode = #tpu.pipeline_mode<synchronous>, transform_indices = @transform_4, window_bounds = array<i64: 1, 128>}, {pipeline_mode = #tpu.pipeline_mode<synchronous>, transform_indices = @transform_5, window_bounds = array<i64: 32, 128>}]} {
    %cst = arith.constant 0.000000e+00 : f32
    %0 = vector.broadcast %cst : f32 to vector<32x128xf32>
    %c0 = arith.constant 0 : index
    %c0_0 = arith.constant 0 : index
    %c0_1 = arith.constant 0 : index
    %1 = vector.load %arg1[%c0, %c0_0, %c0_1] : memref<3x32x72xf32, #tpu.memory_space<vmem>>, vector<1x32x72xf32>
    %2 = vector.shape_cast %1 : vector<1x32x72xf32> to vector<32x72xf32>
    %c0_2 = arith.constant 0 : index
    %c0_3 = arith.constant 0 : index
    %c0_4 = arith.constant 0 : index
    %3 = vector.load %arg2[%c0_2, %c0_3, %c0_4] : memref<3x72x128xf32, #tpu.memory_space<vmem>>, vector<1x72x128xf32>
    %4 = vector.shape_cast %3 : vector<1x72x128xf32> to vector<72x128xf32>
    %cst_5 = arith.constant dense<0.000000e+00> : vector<32x128xf32>
    %5 = tpu.matmul %2, %4, %cst_5 {dimension_numbers = #tpu.dot_dimension_numbers<[1], [0], [0], [1], [0, 0, 1, 1], [], []>} : vector<32x72xf32>, vector<72x128xf32>, vector<32x128xf32> -> vector<32x128xf32>
    %6 = arith.addf %0, %5 : vector<32x128xf32>
    %c1 = arith.constant 1 : index
    %c0_6 = arith.constant 0 : index
    %c0_7 = arith.constant 0 : index
    %7 = vector.load %arg1[%c1, %c0_6, %c0_7] : memref<3x32x72xf32, #tpu.memory_space<vmem>>, vector<1x32x72xf32>
    %8 = vector.shape_cast %7 : vector<1x32x72xf32> to vector<32x72xf32>
    %c1_8 = arith.constant 1 : index
    %c0_9 = arith.constant 0 : index
    %c0_10 = arith.constant 0 : index
    %9 = vector.load %arg2[%c1_8, %c0_9, %c0_10] : memref<3x72x128xf32, #tpu.memory_space<vmem>>, vector<1x72x128xf32>
    %10 = vector.shape_cast %9 : vector<1x72x128xf32> to vector<72x128xf32>
    %cst_11 = arith.constant dense<0.000000e+00> : vector<32x128xf32>
    %11 = tpu.matmul %8, %10, %cst_11 {dimension_numbers = #tpu.dot_dimension_numbers<[1], [0], [0], [1], [0, 0, 1, 1], [], []>} : vector<32x72xf32>, vector<72x128xf32>, vector<32x128xf32> -> vector<32x128xf32>
    %12 = arith.addf %6, %11 : vector<32x128xf32>
    %c2 = arith.constant 2 : index
    %c0_12 = arith.constant 0 : index
    %c0_13 = arith.constant 0 : index
    %13 = vector.load %arg1[%c2, %c0_12, %c0_13] : memref<3x32x72xf32, #tpu.memory_space<vmem>>, vector<1x32x72xf32>
    %14 = vector.shape_cast %13 : vector<1x32x72xf32> to vector<32x72xf32>
    %c2_14 = arith.constant 2 : index
    %c0_15 = arith.constant 0 : index
    %c0_16 = arith.constant 0 : index
    %15 = vector.load %arg2[%c2_14, %c0_15, %c0_16] : memref<3x72x128xf32, #tpu.memory_space<vmem>>, vector<1x72x128xf32>
    %16 = vector.shape_cast %15 : vector<1x72x128xf32> to vector<72x128xf32>
    %cst_17 = arith.constant dense<0.000000e+00> : vector<32x128xf32>
    %17 = tpu.matmul %14, %16, %cst_17 {dimension_numbers = #tpu.dot_dimension_numbers<[1], [0], [0], [1], [0, 0, 1, 1], [], []>} : vector<32x72xf32>, vector<72x128xf32>, vector<32x128xf32> -> vector<32x128xf32>
    %18 = arith.addf %12, %17 : vector<32x128xf32>
    %cst_18 = arith.constant dense<0.000000e+00> : vector<128xf32>
    %19 = vector.multi_reduction <add>, %18, %cst_18 [0] : vector<32x128xf32> to vector<128xf32>
    %20 = vector.shape_cast %19 : vector<128xf32> to vector<1x128xf32>
    %c0_19 = arith.constant 0 : index
    %c0_20 = arith.constant 0 : index
    %21 = vector.load %arg3[%c0_19, %c0_20] : memref<128x128xf32, #tpu.memory_space<vmem>>, vector<128x128xf32>
    %cst_21 = arith.constant dense<0.000000e+00> : vector<1x128xf32>
    %22 = tpu.matmul %20, %21, %cst_21 {dimension_numbers = #tpu.dot_dimension_numbers<[1], [0], [0], [1], [0, 0, 1, 1], [], []>} : vector<1x128xf32>, vector<128x128xf32>, vector<1x128xf32> -> vector<1x128xf32>
    %23 = vector.broadcast %22 : vector<1x128xf32> to vector<32x128xf32>
    %24 = arith.subf %18, %23 : vector<32x128xf32>
    %25 = arith.mulf %24, %24 : vector<32x128xf32>
    %cst_22 = arith.constant dense<0.000000e+00> : vector<128xf32>
    %26 = vector.multi_reduction <add>, %25, %cst_22 [0] : vector<32x128xf32> to vector<128xf32>
    %27 = vector.shape_cast %26 : vector<128xf32> to vector<1x128xf32>
    %c0_23 = arith.constant 0 : index
    %c0_24 = arith.constant 0 : index
    %28 = vector.load %arg3[%c0_23, %c0_24] : memref<128x128xf32, #tpu.memory_space<vmem>>, vector<128x128xf32>
    %cst_25 = arith.constant dense<0.000000e+00> : vector<1x128xf32>
    %29 = tpu.matmul %27, %28, %cst_25 {dimension_numbers = #tpu.dot_dimension_numbers<[1], [0], [0], [1], [0, 0, 1, 1], [], []>} : vector<1x128xf32>, vector<128x128xf32>, vector<1x128xf32> -> vector<1x128xf32>
    %c0_26 = arith.constant 0 : index
    %c0_27 = arith.constant 0 : index
    %30 = vector.load %arg4[%c0_26, %c0_27] : memref<1x128xf32, #tpu.memory_space<vmem>>, vector<1x128xf32>
    %cst_28 = arith.constant 9.99999974E-6 : f32
    %31 = vector.broadcast %cst_28 : f32 to vector<1x128xf32>
    %32 = arith.addf %29, %31 : vector<1x128xf32>
    %33 = math.rsqrt %32 : vector<1x128xf32>
    %34 = arith.mulf %30, %33 : vector<1x128xf32>
    %35 = vector.broadcast %34 : vector<1x128xf32> to vector<32x128xf32>
    %36 = arith.mulf %24, %35 : vector<32x128xf32>
    %c0_29 = arith.constant 0 : index
    %c0_30 = arith.constant 0 : index
    %37 = vector.load %arg5[%c0_29, %c0_30] : memref<1x128xf32, #tpu.memory_space<vmem>>, vector<1x128xf32>
    %38 = vector.broadcast %37 : vector<1x128xf32> to vector<32x128xf32>
    %39 = arith.addf %36, %38 : vector<32x128xf32>
    %cst_31 = arith.constant 0.000000e+00 : f32
    %40 = vector.broadcast %cst_31 : f32 to vector<32x128xf32>
    %41 = arith.maximumf %39, %40 : vector<32x128xf32>
    %c0_32 = arith.constant 0 : index
    %c0_33 = arith.constant 0 : index
    %42 = vector.load %arg6[%c0_32, %c0_33] : memref<32x128xf32, #tpu.memory_space<vmem>>, vector<32x128xf32>
    tpu.vector_store %arg6[%c0_32, %c0_33], %41 {strides = array<i32>} : memref<32x128xf32, #tpu.memory_space<vmem>>, vector<32x128xf32>,
    return
  }
  func.func @transform_0(%arg0: i32) -> (i32, i32, i32) {
    %c0_i32 = arith.constant 0 : i32
    %c0_i32_0 = arith.constant 0 : i32
    %c0_i32_1 = arith.constant 0 : i32
    %c0_i32_2 = arith.constant 0 : i32
    return %c0_i32, %c0_i32_0, %c0_i32_1 : i32, i32, i32
  }
  func.func @transform_1(%arg0: i32) -> (i32, i32, i32) {
    %c0_i32 = arith.constant 0 : i32
    %c0_i32_0 = arith.constant 0 : i32
    %c0_i32_1 = arith.constant 0 : i32
    %c0_i32_2 = arith.constant 0 : i32
    return %c0_i32, %c0_i32_0, %c0_i32_1 : i32, i32, i32
  }
  func.func @transform_2(%arg0: i32) -> (i32, i32) {
    %c0_i32 = arith.constant 0 : i32
    %c0_i32_0 = arith.constant 0 : i32
    %c0_i32_1 = arith.constant 0 : i32
    return %c0_i32, %c0_i32_0 : i32, i32
  }
  func.func @transform_3(%arg0: i32) -> (i32, i32) {
    %c0_i32 = arith.constant 0 : i32
    %c0_i32_0 = arith.constant 0 : i32
    %c0_i32_1 = arith.constant 0 : i32
    return %c0_i32, %c0_i32_0 : i32, i32
  }
  func.func @transform_4(%arg0: i32) -> (i32, i32) {
    %c0_i32 = arith.constant 0 : i32
    %c0_i32_0 = arith.constant 0 : i32
    %c0_i32_1 = arith.constant 0 : i32
    return %c0_i32, %c0_i32_0 : i32, i32
  }
  func.func @transform_5(%arg0: i32) -> (i32, i32) {
    %c0_i32 = arith.constant 0 : i32
    %c0_i32_0 = arith.constant 0 : i32
    %c0_i32_1 = arith.constant 0 : i32
    return %c0_i32, %c0_i32_0 : i32, i32
  }
}

</mosaic_0001>

<llo_original>
// kernel: tile.13
$region0: #{tile.13}
  #allocation0 [shape = 's32[1]{0}', space=sflag, size = 0x4, scoped, tag = 'scoped memory for tile.13']
  %s0 = inlined_call_operand.vmem [shape: f32[8], index: 0, kind: input, shape index: {}]
  %s1 = inlined_call_operand.vmem [shape: f32[16,8], index: 1, kind: output, shape index: {}]
  // Predicated region
  $region2: #{tile.13} parent=0 // pred_check
    _
  $region3: #{tile.13} parent=0 // pred_check_branch
    %3 = sbr.rel (0) target = $region5
  $region4: #{tile.13} parent=0 // pred_region
    _
  $region5: #{tile.13} parent=0 // pred_fallthru
    _
  %v4 = vld [vmem:[%s0] ss:$0 sm:$0xff]
  %5 = vst [vmem:[%s1] sm:$0xff] %v4
  %s6 = scalar_lea.vmem %s1, 8
  %7 = vst [vmem:[%s6] sm:$0xff] %v4

// kernel: tile.14
$region0: #{tile.14}
  %s0 = inlined_call_operand.vmem [shape: f32[16,8], index: 0, kind: input, shape index: {}]
  %s1 = inlined_call_operand.vmem [shape: f32[1,128], index: 1, kind: output, shape index: {}]
  $region1: #{tile.14} parent=0
    #allocation0 [shape = 'u8[4096]{0}', space=vmem, size = 0x1000, scoped, tag = 'scoped mem for output reshape']
    %v2 = vld [vmem:[%s0] sm:$0x1]
    %vm3 = vcmask 64512
    %4 = vst.msk [vmem:[#allocation0] sm:$0x1] %vm3, %v2
    %s5 = scalar_lea.vmem %s0, 15
    %v6 = vld [vmem:[%s5] sm:$0x1]
    %7 = vrot.lane.b32.xlu0 %v6, 120
    %v8 = vpop.permute.xlu0 %7
    %vm9 = vcmask 1048512
    %10 = vst.msk [vmem:[#allocation0] sm:$0x1] %vm9, %v8
    %s11 = scalar_lea.vmem %s0, 14
    %v12 = vld [vmem:[%s11] sm:$0x1]
    %13 = vrot.lane.b32.xlu0 %v12, 112
    %v14 = vpop.permute.xlu0 %13
    %vm15 = vcmask 982912
    %16 = vst.msk [vmem:[#allocation0] sm:$0x1] %vm15, %v14
    %s17 = scalar_lea.vmem %s0, 13
    %v18 = vld [vmem:[%s17] sm:$0x1]
    %19 = vrot.lane.b32.xlu0 %v18, 104
    %v20 = vpop.permute.xlu0 %19
    %vm21 = vcmask 917312
    %22 = vst.msk [vmem:[#allocation0] sm:$0x1] %vm21, %v20
    %s23 = scalar_lea.vmem %s0, 12
    %v24 = vld [vmem:[%s23] sm:$0x1]
    %25 = vrot.lane.b32.xlu0 %v24, 96
    %v26 = vpop.permute.xlu0 %25
    %vm27 = vcmask 851712
    %28 = vst.msk [vmem:[#allocation0] sm:$0x1] %vm27, %v26
    %s29 = scalar_lea.vmem %s0, 11
    %v30 = vld [vmem:[%s29] sm:$0x1]
    %31 = vrot.lane.b32.xlu0 %v30, 88
    %v32 = vpop.permute.xlu0 %31
    %vm33 = vcmask 786112
    %34 = vst.msk [vmem:[#allocation0] sm:$0x1] %vm33, %v32
    %s35 = scalar_lea.vmem %s0, 10
    %v36 = vld [vmem:[%s35] sm:$0x1]
    %37 = vrot.lane.b32.xlu0 %v36, 80
    %v38 = vpop.permute.xlu0 %37
    %vm39 = vcmask 720512
    %40 = vst.msk [vmem:[#allocation0] sm:$0x1] %vm39, %v38
    %s41 = scalar_lea.vmem %s0, 9
    %v42 = vld [vmem:[%s41] sm:$0x1]
    %43 = vrot.lane.b32.xlu0 %v42, 72
    %v44 = vpop.permute.xlu0 %43
    %vm45 = vcmask 654912
    %46 = vst.msk [vmem:[#allocation0] sm:$0x1] %vm45, %v44
    %s47 = scalar_lea.vmem %s0, 8
    %v48 = vld [vmem:[%s47] sm:$0x1]
    %49 = vrot.lane.b32.xlu0 %v48, 64
    %v50 = vpop.permute.xlu0 %49
    %vm51 = vcmask 589312
    %52 = vst.msk [vmem:[#allocation0] sm:$0x1] %vm51, %v50
    %s53 = scalar_lea.vmem %s0, 7
    %v54 = vld [vmem:[%s53] sm:$0x1]
    %55 = vrot.lane.b32.xlu0 %v54, 56
    %v56 = vpop.permute.xlu0 %55
    %vm57 = vcmask 523712
    %58 = vst.msk [vmem:[#allocation0] sm:$0x1] %vm57, %v56
    %s59 = scalar_lea.vmem %s0, 6
    %v60 = vld [vmem:[%s59] sm:$0x1]
    %61 = vrot.lane.b32.xlu0 %v60, 48
    %v62 = vpop.permute.xlu0 %61
    %vm63 = vcmask 458112
    %64 = vst.msk [vmem:[#allocation0] sm:$0x1] %vm63, %v62
    %s65 = scalar_lea.vmem %s0, 5
    %v66 = vld [vmem:[%s65] sm:$0x1]
    %67 = vrot.lane.b32.xlu0 %v66, 40
    %v68 = vpop.permute.xlu0 %67
    %vm69 = vcmask 392512
    %70 = vst.msk [vmem:[#allocation0] sm:$0x1] %vm69, %v68
    %s71 = scalar_lea.vmem %s0, 4
    %v72 = vld [vmem:[%s71] sm:$0x1]
    %73 = vrot.lane.b32.xlu0 %v72, 32
    %v74 = vpop.permute.xlu0 %73
    %vm75 = vcmask 326912
    %76 = vst.msk [vmem:[#allocation0] sm:$0x1] %vm75, %v74
    %s77 = scalar_lea.vmem %s0, 3
    %v78 = vld [vmem:[%s77] sm:$0x1]
    %79 = vrot.lane.b32.xlu0 %v78, 24
    %v80 = vpop.permute.xlu0 %79
    %vm81 = vcmask 261312
    %82 = vst.msk [vmem:[#allocation0] sm:$0x1] %vm81, %v80
    %s83 = scalar_lea.vmem %s0, 2
    %v84 = vld [vmem:[%s83] sm:$0x1]
    %85 = vrot.lane.b32.xlu0 %v84, 16
    %v86 = vpop.permute.xlu0 %85
    %vm87 = vcmask 195712
    %88 = vst.msk [vmem:[#allocation0] sm:$0x1] %vm87, %v86
    %s89 = scalar_lea.vmem %s0, 1
    %v90 = vld [vmem:[%s89] sm:$0x1]
    %91 = vrot.lane.b32.xlu0 %v90, 8
    %v92 = vpop.permute.xlu0 %91
    %vm93 = vcmask 130112
    %94 = vst.msk [vmem:[#allocation0] sm:$0x1] %vm93, %v92
    %s96 = sshll.u32 1, 1
    %s97 = ssub.s32 %s96, 1
    %v99 = vld [vmem:[#allocation0] sm:%s97]
    %s100 = sshll.u32 1, 1
    %s101 = ssub.s32 %s100, 1
    %102 = vst [vmem:[%s1] sm:%s101] %v99

// kernel: conv_bn_relu.1
$region0: #{conv_bn_relu.1}
  #allocation0 [shape = 'u32[]', space=smem, size = 0x4, offset = 0x4, fixed_abs, tag = 'smem constant byte address 0x4 - core index']
  #allocation1 [shape = 'u32[144,128]{1,0:T(1,128)}', space=vmem, size = 0x12000, scoped, tag = 'internal scratch']
  %s0 = inlined_call_operand.vmem [shape: f32[3,32,72], index: 0, kind: input, shape index: {}]
  %s1 = inlined_call_operand.vmem [shape: f32[3,72,128], index: 1, kind: input, shape index: {}]
  %s2 = inlined_call_operand.vmem [shape: f32[128,128], index: 2, kind: input, shape index: {}]
  %s3 = inlined_call_operand.vmem [shape: f32[1,128], index: 3, kind: input, shape index: {}]
  %s4 = inlined_call_operand.vmem [shape: f32[1,128], index: 4, kind: input, shape index: {}]
  %s5 = inlined_call_operand.vmem [shape: f32[32,128], index: 5, kind: output, shape index: {}]
  %s6 = sld [smem:[#allocation0]]
  $region30: #{conv_bn_relu.1} parent=0
    _
  %s8 = ssub.s32 1, %s6
  %s9 = scalar_select 0, %s8, %s6
  // Predicated region
  $region2: #{conv_bn_relu.1} parent=0 // pred_check
    _
  $region3: #{conv_bn_relu.1} parent=0 // pred_check_branch
    %11 = sbr.rel (0) target = $region5
  $region4: #{conv_bn_relu.1} parent=0 // pred_region
    _
  $region5: #{conv_bn_relu.1} parent=0 // pred_fallthru
    _
  // Predicated region
  $region6: #{conv_bn_relu.1} parent=0 // pred_check
    _
  $region7: #{conv_bn_relu.1} parent=0 // pred_check_branch
    %13 = sbr.rel (0) target = $region9
  $region8: #{conv_bn_relu.1} parent=0 // pred_region
    _
  $region9: #{conv_bn_relu.1} parent=0 // pred_fallthru
    _
  // Predicated region
  $region10: #{conv_bn_relu.1} parent=0 // pred_check
    _
  $region11: #{conv_bn_relu.1} parent=0 // pred_check_branch
    %15 = sbr.rel (0) target = $region13
  $region12: #{conv_bn_relu.1} parent=0 // pred_region
    _
  $region13: #{conv_bn_relu.1} parent=0 // pred_fallthru
    _
  // Predicated region
  $region14: #{conv_bn_relu.1} parent=0 // pred_check
    _
  $region15: #{conv_bn_relu.1} parent=0 // pred_check_branch
    %17 = sbr.rel (0) target = $region17
  $region16: #{conv_bn_relu.1} parent=0 // pred_region
    _
  $region17: #{conv_bn_relu.1} parent=0 // pred_fallthru
    _
  // Predicated region
  $region18: #{conv_bn_relu.1} parent=0 // pred_check
    _
  $region19: #{conv_bn_relu.1} parent=0 // pred_check_branch
    %19 = sbr.rel (0) target = $region21
  $region20: #{conv_bn_relu.1} parent=0 // pred_region
    _
  $region21: #{conv_bn_relu.1} parent=0 // pred_fallthru
    _
  %v20 = vld [vmem:[%s0] sm:$0xff]
  %v21 = vld [vmem:[%s0 + $0x8] sm:$0xff]
  %v22 = vld [vmem:[%s0 + $0x10] sm:$0xff]
  %v23 = vld [vmem:[%s0 + $0x18] sm:$0xff]
  %v24 = vld [vmem:[%s1] sm:$0xff]
  %v25 = vld [vmem:[%s1 + $0x8] sm:$0xff]
  %v26 = vld [vmem:[%s1 + $0x10] sm:$0xff]
  %v27 = vld [vmem:[%s1 + $0x18] sm:$0xff]
  %v28 = vld [vmem:[%s1 + $0x20] sm:$0xff]
  %v29 = vld [vmem:[%s1 + $0x28] sm:$0xff]
  %v30 = vld [vmem:[%s1 + $0x30] sm:$0xff]
  %v31 = vld [vmem:[%s1 + $0x38] sm:$0xff]
  %v32 = vld [vmem:[%s1 + $0x40] sm:$0xff]
  %s33 = scalar_lea.vmem %s0, 32
  %v34 = vld [vmem:[%s33] sm:$0xff]
  %v35 = vld [vmem:[%s33 + $0x8] sm:$0xff]
  %v36 = vld [vmem:[%s33 + $0x10] sm:$0xff]
  %v37 = vld [vmem:[%s33 + $0x18] sm:$0xff]
  %s38 = scalar_lea.vmem %s1, 72
  %v39 = vld [vmem:[%s38] sm:$0xff]
  %v40 = vld [vmem:[%s38 + $0x8] sm:$0xff]
  %v41 = vld [vmem:[%s38 + $0x10] sm:$0xff]
  %v42 = vld [vmem:[%s38 + $0x18] sm:$0xff]
  %v43 = vld [vmem:[%s38 + $0x20] sm:$0xff]
  %v44 = vld [vmem:[%s38 + $0x28] sm:$0xff]
  %v45 = vld [vmem:[%s38 + $0x30] sm:$0xff]
  %v46 = vld [vmem:[%s38 + $0x38] sm:$0xff]
  %v47 = vld [vmem:[%s38 + $0x40] sm:$0xff]
  %vm48 = vcmask 588800
  %v50 = vsel %vm48, %v34, 0
  %v53 = vsel %vm48, %v35, 0
  %v56 = vsel %vm48, %v36, 0
  %v59 = vsel %vm48, %v37, 0
  %61 = vmatprep.subr.mxu0 0.0
  %62 = vmatpush1.msra.mxu0 0.0
  %63 = vmatprep.subr.mxu0 0.0
  %64 = vmatpush1.msra.mxu0 0.0
  %65 = vmatprep.subr.mxu0 0.0
  %66 = vmatpush1.msra.mxu0 0.0
  %67 = vmatprep.subr.mxu0 0.0
  %68 = vmatpush1.msra.mxu0 0.0
  %69 = vmatprep.subr.mxu0 0.0
  %70 = vmatpush1.msra.mxu0 0.0
  %71 = vmatprep.subr.mxu0 0.0
  %72 = vmatpush1.msra.mxu0 0.0
  %73 = vmatprep.subr.mxu0 0.0
  %74 = vmatpush1.msra.mxu0 0.0
  %75 = vmatprep.subr.mxu0 0.0
  %76 = vmatpush1.msra.mxu0 %v47
  %77 = vmatprep.subr.mxu0 0.0
  %78 = vmatpush1.msra.mxu0 %v46
  %79 = vmatprep.subr.mxu0 0.0
  %80 = vmatpush1.msra.mxu0 %v45
  %81 = vmatprep.subr.mxu0 0.0
  %82 = vmatpush1.msra.mxu0 %v44
  %83 = vmatprep.subr.mxu0 0.0
  %84 = vmatpush1.msra.mxu0 %v43
  %85 = vmatprep.subr.mxu0 0.0
  %86 = vmatpush1.msra.mxu0 %v42
  %87 = vmatprep.subr.mxu0 0.0
  %88 = vmatpush1.msra.mxu0 %v41
  %89 = vmatprep.subr.mxu0 0.0
  %90 = vmatpush1.msra.mxu0 %v40
  %91 = vmatprep.subr.mxu0 0.0
  %92 = vmatpush1.msra.mxu0 %v39
  %93 = vmatprep.subr.mxu0 0.0
  %94 = vmatpush2.msra.mxu0 0.0
  %95 = vmatprep.subr.mxu0 0.0
  %96 = vmatpush2.msra.mxu0 0.0
  %97 = vmatprep.subr.mxu0 0.0
  %98 = vmatpush2.msra.mxu0 0.0
  %99 = vmatprep.subr.mxu0 0.0
  %100 = vmatpush2.msra.mxu0 0.0
  %101 = vmatprep.subr.mxu0 0.0
  %102 = vmatpush2.msra.mxu0 0.0
  %103 = vmatprep.subr.mxu0 0.0
  %104 = vmatpush2.msra.mxu0 0.0
  %105 = vmatprep.subr.mxu0 0.0
  %106 = vmatpush2.msra.mxu0 0.0
  %107 = vmatprep.subr.mxu0 0.0
  %108 = vmatpush2.msra.mxu0 0.0
  %109 = vmatprep.subr.mxu0 0.0
  %110 = vmatpush2.msra.mxu0 0.0
  %111 = vmatprep.subr.mxu0 0.0
  %112 = vmatpush2.msra.mxu0 0.0
  %113 = vmatprep.subr.mxu0 0.0
  %114 = vmatpush2.msra.mxu0 0.0
  %115 = vmatprep.subr.mxu0 0.0
  %116 = vmatpush2.msra.mxu0 0.0
  %117 = vmatprep.subr.mxu0 0.0
  %118 = vmatpush2.msra.mxu0 0.0
  %119 = vmatprep.subr.mxu0 0.0
  %120 = vmatpush2.msra.mxu0 0.0
  %121 = vmatprep.subr.mxu0 0.0
  %122 = vmatpush2.msra.mxu0 0.0
  %123 = vmatprep.subr.mxu0 0.0
  %124 = vmatpush2.msra.mxu0 0.0
  %125 = vmatprep.mubr.f32.mxu0 0.0
  %126 = vmatmul.mubr.f32.gmra.mxu0 %v50
  %v127 = vpop.f32.mrf.mxu0
  %v128 = vadd.f32 0.0, %v127
  %v129 = vpop.f32.mrf.mxu0
  %130 = vmatprep.mubr.f32.mxu0 0.0
  %131 = vmatmul.mubr.f32.gmra.mxu0 %v53
  %v132 = vpop.f32.mrf.mxu0
  %v133 = vadd.f32 0.0, %v132
  %v134 = vpop.f32.mrf.mxu0
  %135 = vmatprep.mubr.f32.mxu0 0.0
  %136 = vmatmul.mubr.f32.gmra.mxu0 %v56
  %v137 = vpop.f32.mrf.mxu0
  %v138 = vadd.f32 0.0, %v137
  %v139 = vpop.f32.mrf.mxu0
  %140 = vmatprep.mubr.f32.mxu0 0.0
  %141 = vmatmul.mubr.f32.gmra.mxu0 %v59
  %v142 = vpop.f32.mrf.mxu0
  %v143 = vadd.f32 0.0, %v142
  %v144 = vpop.f32.mrf.mxu0
  %145 = vdwg.mxu0
  %v147 = vsel %vm48, %v20, 0
  %v150 = vsel %vm48, %v21, 0
  %v153 = vsel %vm48, %v22, 0
  %v156 = vsel %vm48, %v23, 0
  %158 = vmatprep.subr.mxu0 0.0
  %159 = vmatpush1.msra.mxu0 0.0
  %160 = vmatprep.subr.mxu0 0.0
  %161 = vmatpush1.msra.mxu0 0.0
  %162 = vmatprep.subr.mxu0 0.0
  %163 = vmatpush1.msra.mxu0 0.0
  %164 = vmatprep.subr.mxu0 0.0
  %165 = vmatpush1.msra.mxu0 0.0
  %166 = vmatprep.subr.mxu0 0.0
  %167 = vmatpush1.msra.mxu0 0.0
  %168 = vmatprep.subr.mxu0 0.0
  %169 = vmatpush1.msra.mxu0 0.0
  %170 = vmatprep.subr.mxu0 0.0
  %171 = vmatpush1.msra.mxu0 0.0
  %172 = vmatprep.subr.mxu0 0.0
  %173 = vmatpush1.msra.mxu0 %v32
  %174 = vmatprep.subr.mxu0 0.0
  %175 = vmatpush1.msra.mxu0 %v31
  %176 = vmatprep.subr.mxu0 0.0
  %177 = vmatpush1.msra.mxu0 %v30
  %178 = vmatprep.subr.mxu0 0.0
  %179 = vmatpush1.msra.mxu0 %v29
  %180 = vmatprep.subr.mxu0 0.0
  %181 = vmatpush1.msra.mxu0 %v28
  %182 = vmatprep.subr.mxu0 0.0
  %183 = vmatpush1.msra.mxu0 %v27
  %184 = vmatprep.subr.mxu0 0.0
  %185 = vmatpush1.msra.mxu0 %v26
  %186 = vmatprep.subr.mxu0 0.0
  %187 = vmatpush1.msra.mxu0 %v25
  %188 = vmatprep.subr.mxu0 0.0
  %189 = vmatpush1.msra.mxu0 %v24
  %190 = vmatprep.subr.mxu0 0.0
  %191 = vmatpush2.msra.mxu0 0.0
  %192 = vmatprep.subr.mxu0 0.0
  %193 = vmatpush2.msra.mxu0 0.0
  %194 = vmatprep.subr.mxu0 0.0
  %195 = vmatpush2.msra.mxu0 0.0
  %196 = vmatprep.subr.mxu0 0.0
  %197 = vmatpush2.msra.mxu0 0.0
  %198 = vmatprep.subr.mxu0 0.0
  %199 = vmatpush2.msra.mxu0 0.0
  %200 = vmatprep.subr.mxu0 0.0
  %201 = vmatpush2.msra.mxu0 0.0
  %202 = vmatprep.subr.mxu0 0.0
  %203 = vmatpush2.msra.mxu0 0.0
  %204 = vmatprep.subr.mxu0 0.0
  %205 = vmatpush2.msra.mxu0 0.0
  %206 = vmatprep.subr.mxu0 0.0
  %207 = vmatpush2.msra.mxu0 0.0
  %208 = vmatprep.subr.mxu0 0.0
  %209 = vmatpush2.msra.mxu0 0.0
  %210 = vmatprep.subr.mxu0 0.0
  %211 = vmatpush2.msra.mxu0 0.0
  %212 = vmatprep.subr.mxu0 0.0
  %213 = vmatpush2.msra.mxu0 0.0
  %214 = vmatprep.subr.mxu0 0.0
  %215 = vmatpush2.msra.mxu0 0.0
  %216 = vmatprep.subr.mxu0 0.0
  %217 = vmatpush2.msra.mxu0 0.0
  %218 = vmatprep.subr.mxu0 0.0
  %219 = vmatpush2.msra.mxu0 0.0
  %220 = vmatprep.subr.mxu0 0.0
  %221 = vmatpush2.msra.mxu0 0.0
  %222 = vmatprep.mubr.f32.mxu0 0.0
  %223 = vmatmul.mubr.f32.gmra.mxu0 %v147
  %v224 = vpop.f32.mrf.mxu0
  %v225 = vadd.f32 %v128, %v224
  %v226 = vpop.f32.mrf.mxu0
  %227 = vmatprep.mubr.f32.mxu0 0.0
  %228 = vmatmul.mubr.f32.gmra.mxu0 %v150
  %v229 = vpop.f32.mrf.mxu0
  %v230 = vadd.f32 %v133, %v229
  %v231 = vpop.f32.mrf.mxu0
  %232 = vmatprep.mubr.f32.mxu0 0.0
  %233 = vmatmul.mubr.f32.gmra.mxu0 %v153
  %v234 = vpop.f32.mrf.mxu0
  %v235 = vadd.f32 %v138, %v234
  %v236 = vpop.f32.mrf.mxu0
  %237 = vmatprep.mubr.f32.mxu0 0.0
  %238 = vmatmul.mubr.f32.gmra.mxu0 %v156
  %v239 = vpop.f32.mrf.mxu0
  %v240 = vadd.f32 %v143, %v239
  %v241 = vpop.f32.mrf.mxu0
  %242 = vdwg.mxu0
  %s243 = scalar_lea.vmem %s0, 64
  %v244 = vld [vmem:[%s243] sm:$0xff]
  %v245 = vld [vmem:[%s243 + $0x8] sm:$0xff]
  %v246 = vld [vmem:[%s243 + $0x10] sm:$0xff]
  %v247 = vld [vmem:[%s243 + $0x18] sm:$0xff]
  %s248 = scalar_lea.vmem %s1, 144
  %v249 = vld [vmem:[%s248] sm:$0xff]
  %v250 = vld [vmem:[%s248 + $0x8] sm:$0xff]
  %v251 = vld [vmem:[%s248 + $0x10] sm:$0xff]
  %v252 = vld [vmem:[%s248 + $0x18] sm:$0xff]
  %v253 = vld [vmem:[%s248 + $0x20] sm:$0xff]
  %v254 = vld [vmem:[%s248 + $0x28] sm:$0xff]
  %v255 = vld [vmem:[%s248 + $0x30] sm:$0xff]
  %v256 = vld [vmem:[%s248 + $0x38] sm:$0xff]
  %v257 = vld [vmem:[%s248 + $0x40] sm:$0xff]
  %v259 = vsel %vm48, %v244, 0
  %v262 = vsel %vm48, %v245, 0
  %v265 = vsel %vm48, %v246, 0
  %v268 = vsel %vm48, %v247, 0
  %270 = vmatprep.subr.mxu0 0.0
  %271 = vmatpush1.msra.mxu0 0.0
  %272 = vmatprep.subr.mxu0 0.0
  %273 = vmatpush1.msra.mxu0 0.0
  %274 = vmatprep.subr.mxu0 0.0
  %275 = vmatpush1.msra.mxu0 0.0
  %276 = vmatprep.subr.mxu0 0.0
  %277 = vmatpush1.msra.mxu0 0.0
  %278 = vmatprep.subr.mxu0 0.0
  %279 = vmatpush1.msra.mxu0 0.0
  %280 = vmatprep.subr.mxu0 0.0
  %281 = vmatpush1.msra.mxu0 0.0
  %282 = vmatprep.subr.mxu0 0.0
  %283 = vmatpush1.msra.mxu0 0.0
  %284 = vmatprep.subr.mxu0 0.0
  %285 = vmatpush1.msra.mxu0 %v257
  %286 = vmatprep.subr.mxu0 0.0
  %287 = vmatpush1.msra.mxu0 %v256
  %288 = vmatprep.subr.mxu0 0.0
  %289 = vmatpush1.msra.mxu0 %v255
  %290 = vmatprep.subr.mxu0 0.0
  %291 = vmatpush1.msra.mxu0 %v254
  %292 = vmatprep.subr.mxu0 0.0
  %293 = vmatpush1.msra.mxu0 %v253
  %294 = vmatprep.subr.mxu0 0.0
  %295 = vmatpush1.msra.mxu0 %v252
  %296 = vmatprep.subr.mxu0 0.0
  %297 = vmatpush1.msra.mxu0 %v251
  %298 = vmatprep.subr.mxu0 0.0
  %299 = vmatpush1.msra.mxu0 %v250
  %300 = vmatprep.subr.mxu0 0.0
  %301 = vmatpush1.msra.mxu0 %v249
  %302 = vmatprep.subr.mxu0 0.0
  %303 = vmatpush2.msra.mxu0 0.0
  %304 = vmatprep.subr.mxu0 0.0
  %305 = vmatpush2.msra.mxu0 0.0
  %306 = vmatprep.subr.mxu0 0.0
  %307 = vmatpush2.msra.mxu0 0.0
  %308 = vmatprep.subr.mxu0 0.0
  %309 = vmatpush2.msra.mxu0 0.0
  %310 = vmatprep.subr.mxu0 0.0
  %311 = vmatpush2.msra.mxu0 0.0
  %312 = vmatprep.subr.mxu0 0.0
  %313 = vmatpush2.msra.mxu0 0.0
  %314 = vmatprep.subr.mxu0 0.0
  %315 = vmatpush2.msra.mxu0 0.0
  %316 = vmatprep.subr.mxu0 0.0
  %317 = vmatpush2.msra.mxu0 0.0
  %318 = vmatprep.subr.mxu0 0.0
  %319 = vmatpush2.msra.mxu0 0.0
  %320 = vmatprep.subr.mxu0 0.0
  %321 = vmatpush2.msra.mxu0 0.0
  %322 = vmatprep.subr.mxu0 0.0
  %323 = vmatpush2.msra.mxu0 0.0
  %324 = vmatprep.subr.mxu0 0.0
  %325 = vmatpush2.msra.mxu0 0.0
  %326 = vmatprep.subr.mxu0 0.0
  %327 = vmatpush2.msra.mxu0 0.0
  %328 = vmatprep.subr.mxu0 0.0
  %329 = vmatpush2.msra.mxu0 0.0
  %330 = vmatprep.subr.mxu0 0.0
  %331 = vmatpush2.msra.mxu0 0.0
  %332 = vmatprep.subr.mxu0 0.0
  %333 = vmatpush2.msra.mxu0 0.0
  %334 = vmatprep.mubr.f32.mxu0 0.0
  %335 = vmatmul.mubr.f32.gmra.mxu0 %v259
  %v336 = vpop.f32.mrf.mxu0
  %v337 = vadd.f32 0.0, %v336
  %v338 = vpop.f32.mrf.mxu0
  %339 = vmatprep.mubr.f32.mxu0 0.0
  %340 = vmatmul.mubr.f32.gmra.mxu0 %v262
  %v341 = vpop.f32.mrf.mxu0
  %v342 = vadd.f32 0.0, %v341
  %v343 = vpop.f32.mrf.mxu0
  %344 = vmatprep.mubr.f32.mxu0 0.0
  %345 = vmatmul.mubr.f32.gmra.mxu0 %v265
  %v346 = vpop.f32.mrf.mxu0
  %v347 = vadd.f32 0.0, %v346
  %v348 = vpop.f32.mrf.mxu0
  %349 = vmatprep.mubr.f32.mxu0 0.0
  %350 = vmatmul.mubr.f32.gmra.mxu0 %v268
  %v351 = vpop.f32.mrf.mxu0
  %v352 = vadd.f32 0.0, %v351
  %v353 = vpop.f32.mrf.mxu0
  %354 = vdwg.mxu0
  %v355 = vadd.f32 %v225, %v337
  %v356 = vadd.f32 %v230, %v342
  %v357 = vadd.f32 %v235, %v347
  %v358 = vadd.f32 %v240, %v352
  %v359 = vadd.f32 %v355, %v356
  %v360 = vadd.f32 %v359, %v357
  %v361 = vadd.f32 %v360, %v358
  %v362 = vrot.slane %v361, 4
  %v363 = vadd.f32 %v361, %v362
  %v364 = vrot.slane %v363, 2
  %v365 = vadd.f32 %v363, %v364
  %v366 = vrot.slane %v365, 1
  %v367 = vadd.f32 %v365, %v366
  %v368 = vld [vmem:[%s2] sm:$0xff]
  %v369 = vld [vmem:[%s2 + $0x8] sm:$0xff]
  %v370 = vld [vmem:[%s2 + $0x10] sm:$0xff]
  %v371 = vld [vmem:[%s2 + $0x18] sm:$0xff]
  %v372 = vld [vmem:[%s2 + $0x20] sm:$0xff]
  %v373 = vld [vmem:[%s2 + $0x28] sm:$0xff]
  %v374 = vld [vmem:[%s2 + $0x30] sm:$0xff]
  %v375 = vld [vmem:[%s2 + $0x38] sm:$0xff]
  %v376 = vld [vmem:[%s2 + $0x40] sm:$0xff]
  %v377 = vld [vmem:[%s2 + $0x48] sm:$0xff]
  %v378 = vld [vmem:[%s2 + $0x50] sm:$0xff]
  %v379 = vld [vmem:[%s2 + $0x58] sm:$0xff]
  %v380 = vld [vmem:[%s2 + $0x60] sm:$0xff]
  %v381 = vld [vmem:[%s2 + $0x68] sm:$0xff]
  %v382 = vld [vmem:[%s2 + $0x70] sm:$0xff]
  %v383 = vld [vmem:[%s2 + $0x78] sm:$0xff]
  %384 = vmatprep.subr.mxu0 0.0
  %385 = vmatpush1.msra.mxu0 %v383
  %386 = vmatprep.subr.mxu0 0.0
  %387 = vmatpush1.msra.mxu0 %v382
  %388 = vmatprep.subr.mxu0 0.0
  %389 = vmatpush1.msra.mxu0 %v381
  %390 = vmatprep.subr.mxu0 0.0
  %391 = vmatpush1.msra.mxu0 %v380
  %392 = vmatprep.subr.mxu0 0.0
  %393 = vmatpush1.msra.mxu0 %v379
  %394 = vmatprep.subr.mxu0 0.0
  %395 = vmatpush1.msra.mxu0 %v378
  %396 = vmatprep.subr.mxu0 0.0
  %397 = vmatpush1.msra.mxu0 %v377
  %398 = vmatprep.subr.mxu0 0.0
  %399 = vmatpush1.msra.mxu0 %v376
  %400 = vmatprep.subr.mxu0 0.0
  %401 = vmatpush1.msra.mxu0 %v375
  %402 = vmatprep.subr.mxu0 0.0
  %403 = vmatpush1.msra.mxu0 %v374
  %404 = vmatprep.subr.mxu0 0.0
  %405 = vmatpush1.msra.mxu0 %v373
  %406 = vmatprep.subr.mxu0 0.0
  %407 = vmatpush1.msra.mxu0 %v372
  %408 = vmatprep.subr.mxu0 0.0
  %409 = vmatpush1.msra.mxu0 %v371
  %410 = vmatprep.subr.mxu0 0.0
  %411 = vmatpush1.msra.mxu0 %v370
  %412 = vmatprep.subr.mxu0 0.0
  %413 = vmatpush1.msra.mxu0 %v369
  %414 = vmatprep.subr.mxu0 0.0
  %415 = vmatpush1.msra.mxu0 %v368
  %416 = vmatprep.subr.mxu0 0.0
  %417 = vmatpush2.msra.mxu0 0.0
  %418 = vmatprep.subr.mxu0 0.0
  %419 = vmatpush2.msra.mxu0 0.0
  %420 = vmatprep.subr.mxu0 0.0
  %421 = vmatpush2.msra.mxu0 0.0
  %422 = vmatprep.subr.mxu0 0.0
  %423 = vmatpush2.msra.mxu0 0.0
  %424 = vmatprep.subr.mxu0 0.0
  %425 = vmatpush2.msra.mxu0 0.0
  %426 = vmatprep.subr.mxu0 0.0
  %427 = vmatpush2.msra.mxu0 0.0
  %428 = vmatprep.subr.mxu0 0.0
  %429 = vmatpush2.msra.mxu0 0.0
  %430 = vmatprep.subr.mxu0 0.0
  %431 = vmatpush2.msra.mxu0 0.0
  %432 = vmatprep.subr.mxu0 0.0
  %433 = vmatpush2.msra.mxu0 0.0
  %434 = vmatprep.subr.mxu0 0.0
  %435 = vmatpush2.msra.mxu0 0.0
  %436 = vmatprep.subr.mxu0 0.0
  %437 = vmatpush2.msra.mxu0 0.0
  %438 = vmatprep.subr.mxu0 0.0
  %439 = vmatpush2.msra.mxu0 0.0
  %440 = vmatprep.subr.mxu0 0.0
  %441 = vmatpush2.msra.mxu0 0.0
  %442 = vmatprep.subr.mxu0 0.0
  %443 = vmatpush2.msra.mxu0 0.0
  %444 = vmatprep.subr.mxu0 0.0
  %445 = vmatpush2.msra.mxu0 0.0
  %446 = vmatprep.subr.mxu0 0.0
  %447 = vmatpush2.msra.mxu0 0.0
  %448 = vmatprep.mubr.f32.mxu0 0.0
  %449 = vmatmul.mubr.f32.gmra.mxu0 %v367
  %v450 = vpop.f32.mrf.mxu0
  %v451 = vadd.f32 0.0, %v450
  %v452 = vpop.f32.mrf.mxu0
  %453 = vdwg.mxu0
  %v454 = vlaneseq
  %v455 = vshrl.u32 %v454, 7
  %v456 = vsub.s32 0, %v455
  %v457 = vrot.slane %v451, %v456
  %v458 = vsub.f32 %v355, %v457
  %v459 = vsub.f32 %v356, %v457
  %v460 = vsub.f32 %v357, %v457
  %v461 = vsub.f32 %v358, %v457
  %v462 = vmul.f32 %v458, %v458
  %v463 = vmul.f32 %v459, %v459
  %v464 = vmul.f32 %v460, %v460
  %v465 = vmul.f32 %v461, %v461
  %v466 = vadd.f32 %v462, %v463
  %v467 = vadd.f32 %v466, %v464
  %v468 = vadd.f32 %v467, %v465
  %v469 = vrot.slane %v468, 4
  %v470 = vadd.f32 %v468, %v469
  %v471 = vrot.slane %v470, 2
  %v472 = vadd.f32 %v470, %v471
  %v473 = vrot.slane %v472, 1
  %v474 = vadd.f32 %v472, %v473
  %v475 = vld [vmem:[%s3] sm:$0x1]
  %476 = vmatprep.subr.mxu0 0.0
  %477 = vmatpush1.msra.mxu0 %v383
  %478 = vmatprep.subr.mxu0 0.0
  %479 = vmatpush1.msra.mxu0 %v382
  %480 = vmatprep.subr.mxu0 0.0
  %481 = vmatpush1.msra.mxu0 %v381
  %482 = vmatprep.subr.mxu0 0.0
  %483 = vmatpush1.msra.mxu0 %v380
  %484 = vmatprep.subr.mxu0 0.0
  %485 = vmatpush1.msra.mxu0 %v379
  %486 = vmatprep.subr.mxu0 0.0
  %487 = vmatpush1.msra.mxu0 %v378
  %488 = vmatprep.subr.mxu0 0.0
  %489 = vmatpush1.msra.mxu0 %v377
  %490 = vmatprep.subr.mxu0 0.0
  %491 = vmatpush1.msra.mxu0 %v376
  %492 = vmatprep.subr.mxu0 0.0
  %493 = vmatpush1.msra.mxu0 %v375
  %494 = vmatprep.subr.mxu0 0.0
  %495 = vmatpush1.msra.mxu0 %v374
  %496 = vmatprep.subr.mxu0 0.0
  %497 = vmatpush1.msra.mxu0 %v373
  %498 = vmatprep.subr.mxu0 0.0
  %499 = vmatpush1.msra.mxu0 %v372
  %500 = vmatprep.subr.mxu0 0.0
  %501 = vmatpush1.msra.mxu0 %v371
  %502 = vmatprep.subr.mxu0 0.0
  %503 = vmatpush1.msra.mxu0 %v370
  %504 = vmatprep.subr.mxu0 0.0
  %505 = vmatpush1.msra.mxu0 %v369
  %506 = vmatprep.subr.mxu0 0.0
  %507 = vmatpush1.msra.mxu0 %v368
  %508 = vmatprep.subr.mxu0 0.0
  %509 = vmatpush2.msra.mxu0 0.0
  %510 = vmatprep.subr.mxu0 0.0
  %511 = vmatpush2.msra.mxu0 0.0
  %512 = vmatprep.subr.mxu0 0.0
  %513 = vmatpush2.msra.mxu0 0.0
  %514 = vmatprep.subr.mxu0 0.0
  %515 = vmatpush2.msra.mxu0 0.0
  %516 = vmatprep.subr.mxu0 0.0
  %517 = vmatpush2.msra.mxu0 0.0
  %518 = vmatprep.subr.mxu0 0.0
  %519 = vmatpush2.msra.mxu0 0.0
  %520 = vmatprep.subr.mxu0 0.0
  %521 = vmatpush2.msra.mxu0 0.0
  %522 = vmatprep.subr.mxu0 0.0
  %523 = vmatpush2.msra.mxu0 0.0
  %524 = vmatprep.subr.mxu0 0.0
  %525 = vmatpush2.msra.mxu0 0.0
  %526 = vmatprep.subr.mxu0 0.0
  %527 = vmatpush2.msra.mxu0 0.0
  %528 = vmatprep.subr.mxu0 0.0
  %529 = vmatpush2.msra.mxu0 0.0
  %530 = vmatprep.subr.mxu0 0.0
  %531 = vmatpush2.msra.mxu0 0.0
  %532 = vmatprep.subr.mxu0 0.0
  %533 = vmatpush2.msra.mxu0 0.0
  %534 = vmatprep.subr.mxu0 0.0
  %535 = vmatpush2.msra.mxu0 0.0
  %536 = vmatprep.subr.mxu0 0.0
  %537 = vmatpush2.msra.mxu0 0.0
  %538 = vmatprep.subr.mxu0 0.0
  %539 = vmatpush2.msra.mxu0 0.0
  %540 = vmatprep.mubr.f32.mxu0 0.0
  %541 = vmatmul.mubr.f32.gmra.mxu0 %v474
  %v542 = vpop.f32.mrf.mxu0
  %v543 = vadd.f32 1e-05, %v542
  %v544 = vpop.f32.mrf.mxu0
  %545 = vdwg.mxu0
  %v546 = vrsqrt.pop %v543
  %v547 = vmul.f32 %v475, %v546
  %v549 = vlaneseq
  %v550 = vshrl.u32 %v549, 7
  %v551 = vsub.s32 0, %v550
  %v552 = vrot.slane %v547, %v551
  %v554 = vmul.f32 %v458, %v552
  %v555 = vmul.f32 %v459, %v552
  %v556 = vmul.f32 %v460, %v552
  %v557 = vmul.f32 %v461, %v552
  %v558 = vld [vmem:[%s4] sm:$0x1]
  %v560 = vlaneseq
  %v561 = vshrl.u32 %v560, 7
  %v562 = vsub.s32 0, %v561
  %v563 = vrot.slane %v558, %v562
  %v565 = vadd.f32 %v554, %v563
  %v566 = vadd.f32 %v555, %v563
  %v567 = vadd.f32 %v556, %v563
  %v568 = vadd.f32 %v557, %v563
  %v569 = vmax.f32 %v565, 0.0
  %v570 = vmax.f32 %v566, 0.0
  %v571 = vmax.f32 %v567, 0.0
  %v572 = vmax.f32 %v568, 0.0
  %573 = vst [vmem:[%s5] sm:$0xff] %v569
  %574 = vst [vmem:[%s5 + $0x8] sm:$0xff] %v570
  %575 = vst [vmem:[%s5 + $0x10] sm:$0xff] %v571
  %576 = vst [vmem:[%s5 + $0x18] sm:$0xff] %v572
  // Predicated region
  $region22: #{conv_bn_relu.1} parent=0 // pred_check
    _
  $region23: #{conv_bn_relu.1} parent=0 // pred_check_branch
    %578 = sbr.rel (0) target = $region25
  $region24: #{conv_bn_relu.1} parent=0 // pred_region
    _
  $region25: #{conv_bn_relu.1} parent=0 // pred_fallthru
    _
  // Predicated region
  $region26: #{conv_bn_relu.1} parent=0 // pred_check
    _
  $region27: #{conv_bn_relu.1} parent=0 // pred_check_branch
    %580 = sbr.rel (0) target = $region29
  $region28: #{conv_bn_relu.1} parent=0 // pred_region
    _
  $region29: #{conv_bn_relu.1} parent=0 // pred_fallthru
    _

</llo_original>
